<compile_context>
chip_gen: v7x
topology: tpu7x:2x2x1
jax: 0.10.0
libtpu: 0.0.40
codegen_flags: <defaults>
</compile_context>

<pallas_src>
import functools

import jax
import jax.numpy as jnp
from jax.experimental import pallas as pl
from jax.experimental.pallas import tpu as pltpu

_HALO = 8  # halo-block channel width (>= 8 to satisfy the (8, 128) block rule)


def _cdiv(a, b):
    return -(-a // b)


def _gate_from_padded_means(mp, w_ref, k, c_out, out_dtype):
    """k-tap channel conv + sigmoid on zero-padded pooled means.

    mp: (bb, c_out + 2*pad) f32, channels on lanes (zero padding already
    folded in at the edges).  w_ref: (k,) f32 taps in SMEM.
    Returns sigmoid(conv) as (bb, c_out) in out_dtype.
    """
    y = w_ref[0] * mp[:, 0:c_out]
    for j in range(1, k):
        y = y + w_ref[j] * mp[:, j:j + c_out]
    return jax.nn.sigmoid(y).astype(out_dtype)


def _eca_kernel(x_ref, id_ref, w_ref, o_ref, *, k, pad, inv_hw):
    """Single-pass ECA when the whole channel extent fits one block.

    Blocks: x / id / o = (bb, C, HW); w = (k,) f32 in SMEM.
    """
    x = x_ref[...]
    # Global average pool, f32 accumulation (no materialized f32 copy of x).
    m = jnp.sum(x, axis=2, dtype=jnp.float32) * inv_hw          # (bb, C) lanes=C
    bb, c = m.shape
    if pad:
        z = jnp.zeros((bb, pad), jnp.float32)
        mp = jnp.concatenate([z, m, z], axis=1)                 # zero edge padding
    else:
        mp = m
    gate = _gate_from_padded_means(mp, w_ref, k, c, x.dtype)    # (bb, C)
    # Fused scale + residual, stored once, in the activation dtype.
    o_ref[...] = x * gate[:, :, None] + id_ref[...]


def _eca_kernel_csplit(x_ref, xl_ref, xr_ref, id_ref, w_ref, o_ref, *,
                       k, pad, inv_hw, halo):
    """Channel-tiled single-pass ECA.

    Blocks: x / id / o = (bb, Ct, HW); xl / xr = (bb, halo, HW) neighbouring
    channel slices of x.  Only the `pad` channels adjacent to this tile are
    used; they are zeroed at the global channel edges so the conv sees the
    same zero padding as PyTorch's Conv1d.
    """
    c_idx = pl.program_id(1)
    n_c = pl.num_programs(1)

    x = x_ref[...]
    m = jnp.sum(x, axis=2, dtype=jnp.float32) * inv_hw          # (bb, Ct)
    ct = m.shape[1]

    if pad:
        xl = xl_ref[:, pl.ds(halo - pad, pad), :]               # left-neighbour chans
        xr = xr_ref[:, pl.ds(0, pad), :]                        # right-neighbour chans
        ml = jnp.sum(xl, axis=2, dtype=jnp.float32) * inv_hw    # (bb, pad)
        mr = jnp.sum(xr, axis=2, dtype=jnp.float32) * inv_hw    # (bb, pad)
        ml = ml * (c_idx > 0).astype(jnp.float32)               # zero at channel < 0
        mr = mr * (c_idx < n_c - 1).astype(jnp.float32)         # zero at channel >= C
        mp = jnp.concatenate([ml, m, mr], axis=1)               # (bb, Ct + 2*pad)
    else:
        mp = m
    gate = _gate_from_padded_means(mp, w_ref, k, ct, x.dtype)   # (bb, Ct)
    o_ref[...] = x * gate[:, :, None] + id_ref[...]


def _multi_tensorcore():
    """Best-effort: does one device expose >1 TensorCore to a Pallas call?

    v5e/v6e: 1 TC per chip; v7x: 2.  Defaults to True (a few extra grid steps
    only cost ~0.35us each on 1-TC chips).
    """
    try:
        dev = jax.devices()[0]
        n = getattr(dev, "num_cores", None)
        if n is not None:
            return int(n) > 1
        kind = str(getattr(dev, "device_kind", "")).lower()
        if "v5" in kind or "v6" in kind:
            return False
    except Exception:
        pass
    return True


def _choose_tiling(B, C, HW, itemsize, pad, multi_core):
    """Pick (batch block bb, channel tile ct)."""
    slab = C * HW * itemsize
    total = B * slab
    # Per-array block target: big enough for the HBM-roofline plateau, small
    # enough that 3 arrays x 2 pipeline buffers stay far inside VMEM.
    target = (1 << 20) if multi_core else (2 << 20)

    # Desired grid steps: 1 for tiny problems, else enough for software
    # pipelining (and for feeding both v7x TensorCores when multi_core).
    want = 1
    if total > (512 << 10):
        want = 8 if multi_core else 4

    # Batch folding (small slabs) / batch splitting, but never fold so far
    # that the batch alone can't provide the wanted steps.
    bb = max(1, min(B, target // max(slab, 1), max(1, B // want)))
    while B % bb:
        bb -= 1
    nb = B // bb

    ct = C
    block = bb * slab
    # Keep the 2 x 8-channel halo re-read small relative to the main tile,
    # unless the un-split block would blow through VMEM.
    min_ct = 64 if block <= (8 << 20) else 8
    can_split = (C % 8 == 0) and (C >= 2 * min_ct) and (pad <= _HALO)
    if can_split and (nb < want or block > 2 * target):
        nc_goal = max(_cdiv(want, nb), _cdiv(block, target))
        cands = [d for d in range(min_ct, C, 8) if C % d == 0]
        good = [d for d in cands if C // d >= nc_goal]
        if good:
            ct = max(good)
        elif cands:
            ct = min(cands)
    return bb, ct


def eca_block(x, identity, conv_w):
    """ECA forward: x * sigmoid(conv1d(avgpool(x))) + identity.

    x, identity: (B, C, H, W); conv_w: (k,) taps of Conv1d(1, 1, k, bias=False)
    with odd k (the PyTorch module's assumption).
    """
    B, C, H, W = x.shape
    HW = H * W
    k = int(conv_w.shape[0])
    assert k % 2 == 1, "ECA assumes an odd conv kernel size"
    pad = (k - 1) // 2
    itemsize = jnp.dtype(x.dtype).itemsize

    # Free reshapes only -- no HBM transpose round trips.
    xr = x.reshape(B, C, HW)
    idr = identity.reshape(B, C, HW)
    w = conv_w.reshape(-1).astype(jnp.float32)

    multi_core = _multi_tensorcore()
    bb, ct = _choose_tiling(B, C, HW, itemsize, pad, multi_core)
    nb, nc = B // bb, C // ct
    inv_hw = 1.0 / float(HW)
    block_bytes = bb * ct * HW * itemsize

    smem_spec = pl.BlockSpec(memory_space=pltpu.MemorySpace.SMEM)

    if nc == 1:
        # Batch-only grid: one (bb, C, HW) block per step, 3-slab HBM traffic.
        grid = (nb,)
        spec = pl.BlockSpec((bb, C, HW), lambda b: (b, 0, 0))
        in_specs = [spec, spec, smem_spec]
        out_specs = spec
        kernel = functools.partial(_eca_kernel, k=k, pad=pad, inv_hw=inv_hw)
        operands = (xr, idr, w)
        dims = ("parallel",)
        vmem_need = 3 * 2 * block_bytes
    else:
        # Channel-tiled grid: main (bb, ct, HW) blocks plus two 8-channel halo
        # views of x so the channel conv sees its +/-pad neighbours.
        cb = ct // _HALO                       # channel tile size in halo-block units
        n_halo_blocks = C // _HALO
        grid = (nb, nc)
        main = pl.BlockSpec((bb, ct, HW), lambda b, c: (b, c, 0))
        left = pl.BlockSpec(
            (bb, _HALO, HW),
            lambda b, c: (b, jnp.maximum(c * cb - 1, 0), 0))
        right = pl.BlockSpec(
            (bb, _HALO, HW),
            lambda b, c: (b, jnp.minimum((c + 1) * cb, n_halo_blocks - 1), 0))
        in_specs = [main, left, right, main, smem_spec]
        out_specs = main
        kernel = functools.partial(_eca_kernel_csplit, k=k, pad=pad,
                                   inv_hw=inv_hw, halo=_HALO)
        operands = (xr, xr, xr, idr, w)
        dims = ("parallel", "parallel")
        halo_bytes = bb * _HALO * HW * itemsize
        vmem_need = 3 * 2 * block_bytes + 2 * 2 * halo_bytes

    # VMEM limit from actual footprint (+headroom), not a blanket 48 MiB.
    vmem_limit = int(min(96 << 20, max(8 << 20, 2 * vmem_need + (1 << 20))))

    out = pl.pallas_call(
        kernel,
        out_shape=jax.ShapeDtypeStruct((B, C, HW), x.dtype),
        grid=grid,
        in_specs=in_specs,
        out_specs=out_specs,
        compiler_params=pltpu.CompilerParams(
            dimension_semantics=dims,
            vmem_limit_bytes=vmem_limit,
        ),
    )(*operands)
    # TODO(synk): tiny-C / huge-HW slabs with B==1 (e.g. C < 128 at 112x112)
    # still collapse to few grid steps; an HW-tiled two-pass (pool kernel +
    # apply kernel) would restore pipelining there at ~4-slab traffic.
    return out.reshape(B, C, H, W)


def eca_reference(x, identity, conv_w):
    """Pure-JAX reference matching the PyTorch semantics."""
    B, C, H, W = x.shape
    m = jnp.mean(x.astype(jnp.float32), axis=(2, 3))            # (B, C)
    k = conv_w.shape[0]
    pad = (k - 1) // 2
    mp = jnp.pad(m, ((0, 0), (pad, pad)))
    y = jnp.zeros_like(m)
    for j in range(k):
        y = y + conv_w[j] * mp[:, j:j + C]
    gate = jax.nn.sigmoid(y).astype(x.dtype)[:, :, None, None]
    return x * gate + identity


if __name__ == "__main__":
    root = jax.random.PRNGKey(0)
    keys = jax.random.split(root, 9)

    def _check(xk, ik, wk, shape, ksize, name):
        x = jax.random.normal(xk, shape, dtype=jnp.float32)
        ident = jax.random.normal(ik, shape, dtype=jnp.float32)
        w = jax.random.normal(wk, (ksize,), dtype=jnp.float32) * 0.5
        out = jax.block_until_ready(eca_block(x, ident, w))
        ref = eca_reference(x, ident, w)
        assert out.shape == shape, f"{name}: bad output shape {out.shape}"
        assert jnp.allclose(out, ref, atol=1e-4, rtol=1e-4), f"{name}: mismatch"

    # Small batch-grid case (batch folding; HW = 256 on lanes).
    _check(keys[0], keys[1], keys[2], (2, 4, 16, 16), 3, "case1")
    # ResNet-stage-like shape: HW = 49 < 128 lanes (masked stores, no transposes).
    _check(keys[3], keys[4], keys[5], (2, 128, 7, 7), 3, "case2")
    # B == 1, 1 MiB slab: exercises the channel-tiled halo path (grid (1, 4)).
    _check(keys[6], keys[7], keys[8], (1, 256, 32, 32), 3, "case3")

    print("KERNEL_OK")
</pallas_src>

<mosaic_0001>
module attributes {stable_mosaic.version = 11 : i64} {
  func.func @_eca_kernel(%arg0: i32, %arg1: memref<2x4x256xf32, #tpu.memory_space<vmem>>, %arg2: memref<2x4x256xf32, #tpu.memory_space<vmem>>, %arg3: memref<3xf32, #tpu.memory_space<smem>>, %arg4: memref<2x4x256xf32, #tpu.memory_space<vmem>>) attributes {dimension_semantics = [#tpu.dimension_semantics<parallel>], iteration_bounds = array<i64: 1>, scalar_prefetch = 0 : i64, scratch_operands = 0 : i64, tpu.core_type = #tpu.core_type<tc>, window_params = [{transform_indices = @transform_0, window_bounds = array<i64: 2, 4, 256>}, {transform_indices = @transform_1, window_bounds = array<i64: 2, 4, 256>}, {transform_indices = @transform_2, window_bounds = array<i64: 3>}, {transform_indices = @transform_3, window_bounds = array<i64: 2, 4, 256>}]} {
    %c0 = arith.constant 0 : index
    %c0_0 = arith.constant 0 : index
    %c0_1 = arith.constant 0 : index
    %0 = vector.load %arg1[%c0, %c0_0, %c0_1] : memref<2x4x256xf32, #tpu.memory_space<vmem>>, vector<2x4x256xf32>
    %cst = arith.constant dense<0.000000e+00> : vector<2x4xf32>
    %1 = vector.multi_reduction <add>, %0, %cst [2] : vector<2x4x256xf32> to vector<2x4xf32>
    %cst_2 = arith.constant 3.906250e-03 : f32
    %2 = vector.broadcast %cst_2 : f32 to vector<2x4xf32>
    %3 = arith.mulf %1, %2 : vector<2x4xf32>
    %cst_3 = arith.constant 0.000000e+00 : f32
    %4 = vector.broadcast %cst_3 : f32 to vector<2x1xf32>
    %5 = tpu.concatenate %4, %3, %4 in 1 : vector<2x1xf32>, vector<2x4xf32>, vector<2x1xf32> -> vector<2x6xf32>
    %c0_4 = arith.constant 0 : index
    %6 = memref.load %arg3[%c0_4] : memref<3xf32, #tpu.memory_space<smem>>
    %7 = vector.extract_strided_slice %5 {offsets = [0, 0], sizes = [2, 4], strides = [1, 1]} : vector<2x6xf32> to vector<2x4xf32>
    %8 = vector.broadcast %6 : f32 to vector<2x4xf32>
    %9 = arith.mulf %8, %7 : vector<2x4xf32>
    %c1 = arith.constant 1 : index
    %10 = memref.load %arg3[%c1] : memref<3xf32, #tpu.memory_space<smem>>
    %11 = vector.extract_strided_slice %5 {offsets = [0, 1], sizes = [2, 4], strides = [1, 1]} : vector<2x6xf32> to vector<2x4xf32>
    %12 = vector.broadcast %10 : f32 to vector<2x4xf32>
    %13 = arith.mulf %12, %11 : vector<2x4xf32>
    %14 = arith.addf %9, %13 : vector<2x4xf32>
    %c2 = arith.constant 2 : index
    %15 = memref.load %arg3[%c2] : memref<3xf32, #tpu.memory_space<smem>>
    %16 = vector.extract_strided_slice %5 {offsets = [0, 2], sizes = [2, 4], strides = [1, 1]} : vector<2x6xf32> to vector<2x4xf32>
    %17 = vector.broadcast %15 : f32 to vector<2x4xf32>
    %18 = arith.mulf %17, %16 : vector<2x4xf32>
    %19 = arith.addf %14, %18 : vector<2x4xf32>
    %20 = arith.negf %19 : vector<2x4xf32>
    %21 = math.exp %20 : vector<2x4xf32>
    %cst_5 = arith.constant 1.000000e+00 : f32
    %22 = vector.broadcast %cst_5 : f32 to vector<2x4xf32>
    %23 = arith.addf %22, %21 : vector<2x4xf32>
    %24 = arith.divf %22, %23 : vector<2x4xf32>
    %25 = vector.shape_cast %24 : vector<2x4xf32> to vector<2x4x1xf32>
    %26 = vector.broadcast %25 : vector<2x4x1xf32> to vector<2x4x256xf32>
    %27 = arith.mulf %0, %26 : vector<2x4x256xf32>
    %c0_6 = arith.constant 0 : index
    %c0_7 = arith.constant 0 : index
    %c0_8 = arith.constant 0 : index
    %28 = vector.load %arg2[%c0_6, %c0_7, %c0_8] : memref<2x4x256xf32, #tpu.memory_space<vmem>>, vector<2x4x256xf32>
    %29 = arith.addf %27, %28 : vector<2x4x256xf32>
    %c0_9 = arith.constant 0 : index
    %c0_10 = arith.constant 0 : index
    %c0_11 = arith.constant 0 : index
    %30 = vector.load %arg4[%c0_9, %c0_10, %c0_11] : memref<2x4x256xf32, #tpu.memory_space<vmem>>, vector<2x4x256xf32>
    tpu.vector_store %arg4[%c0_9, %c0_10, %c0_11], %29 {strides = array<i32>} : memref<2x4x256xf32, #tpu.memory_space<vmem>>, vector<2x4x256xf32>,
    return
  }
  func.func @transform_0(%arg0: i32) -> (i32, i32, i32) {
    %c0_i32 = arith.constant 0 : i32
    %c0_i32_0 = arith.constant 0 : i32
    %c0_i32_1 = arith.constant 0 : i32
    return %arg0, %c0_i32, %c0_i32_0 : i32, i32, i32
  }
  func.func @transform_1(%arg0: i32) -> (i32, i32, i32) {
    %c0_i32 = arith.constant 0 : i32
    %c0_i32_0 = arith.constant 0 : i32
    %c0_i32_1 = arith.constant 0 : i32
    return %arg0, %c0_i32, %c0_i32_0 : i32, i32, i32
  }
  func.func @transform_2(%arg0: i32) -> i32 {
    %c0_i32 = arith.constant 0 : i32
    %c0_i32_0 = arith.constant 0 : i32
    return %c0_i32 : i32
  }
  func.func @transform_3(%arg0: i32) -> (i32, i32, i32) {
    %c0_i32 = arith.constant 0 : i32
    %c0_i32_0 = arith.constant 0 : i32
    %c0_i32_1 = arith.constant 0 : i32
    return %arg0, %c0_i32, %c0_i32_0 : i32, i32, i32
  }
}

</mosaic_0001>

<llo_original>
// kernel: tpu_custom_call.1
$region0: #{tpu_custom_call.1}
  #allocation0 [shape = 'u32[]', space=smem, size = 0x4, offset = 0x4, fixed_abs, tag = 'smem constant byte address 0x4 - core index']
  #allocation1 [shape = 'u32[144,128]{1,0:T(1,128)}', space=vmem, size = 0x12000, scoped, tag = 'internal scratch']
  %s0 = inlined_call_operand.hbm [shape: f32[2,4,256], index: 0, kind: input, shape index: {}]
  %s1 = inlined_call_operand.hbm [shape: f32[2,4,256], index: 1, kind: input, shape index: {}]
  %s2 = inlined_call_operand.vmem [shape: f32[3], index: 2, kind: input, shape index: {}]
  %s3 = inlined_call_operand.hbm [shape: f32[2,4,256], index: 3, kind: output, shape index: {}]
  %s4 = sld [smem:[#allocation0]]
  $region34: #{tpu_custom_call.1} parent=0
    _
  %s6 = ssub.s32 1, %s4
  %s7 = scalar_select 0, %s6, %s4
  $region1: #{tpu_custom_call.1} parent=0
    #allocation2 [shape = 'u8[8192]{0}', space=vmem, size = 0x2000, scoped, tag = 'input window, operand 0, single buffered']
    #allocation3 [shape = 's32[1]{0}', space=sflag, size = 0x4, scoped, tag = 'scoped memory for tpu_custom_call.1']
    #allocation4 [shape = 's32[1]{0}', space=sflag, size = 0x4, scoped, tag = 'scoped memory for tpu_custom_call.1']
    #allocation5 [shape = 's32[1]{0}', space=sflag, size = 0x4, scoped, tag = 'scoped memory for tpu_custom_call.1']
    #allocation6 [shape = 'u8[8192]{0}', space=vmem, size = 0x2000, scoped, tag = 'input window, operand 1, single buffered']
    #allocation7 [shape = 's32[1]{0}', space=sflag, size = 0x4, scoped, tag = 'scoped memory for tpu_custom_call.1']
    #allocation8 [shape = 'u8[512]{0}', space=smem, size = 0x200, scoped, tag = 'input window, operand 2, single buffered']
    #allocation9 [shape = 'u8[8192]{0}', space=vmem, size = 0x2000, scoped, tag = 'output window, operand 0, single buffered']
    %8 = vsyncpa [#allocation3], 0
    %9 = vsyncpa [#allocation7], 0
    %10 = vsyncpa [#allocation5], 0
    %11 = vsyncpa [#allocation4], 0
    // Predicated region
    $region2: #{tpu_custom_call.1} parent=1 // pred_check
      _
    $region3: #{tpu_custom_call.1} parent=1 // pred_check_branch
      %13 = sbr.rel (0) target = $region5
    $region4: #{tpu_custom_call.1} parent=1 // pred_region
      %s15 = ssub.s32 256, 256
      %16 = vsyncadd [#allocation3], %s15
      %s17 = sshll.u32 [#allocation2], 4
      %s18 = int_to_ptr.vmem [resolvable:$true] %s17
      %23 = dma.hbm_to_vmem [thread:$0]  %s0, 256, %s18, [#allocation3], 128, 128, 8
    $region5: #{tpu_custom_call.1} parent=1 // pred_fallthru
      _
    // Predicated region
    $region6: #{tpu_custom_call.1} parent=1 // pred_check
      _
    $region7: #{tpu_custom_call.1} parent=1 // pred_check_branch
      %25 = sbr.rel (0) target = $region9
    $region8: #{tpu_custom_call.1} parent=1 // pred_region
      %s27 = ssub.s32 256, 256
      %28 = vsyncadd [#allocation7], %s27
      %s29 = sshll.u32 [#allocation6], 4
      %s30 = int_to_ptr.vmem [resolvable:$true] %s29
      %35 = dma.hbm_to_vmem [thread:$0]  %s1, 256, %s30, [#allocation7], 128, 128, 8
    $region9: #{tpu_custom_call.1} parent=1 // pred_fallthru
      _
    // Predicated region
    $region10: #{tpu_custom_call.1} parent=1 // pred_check
      _
    $region11: #{tpu_custom_call.1} parent=1 // pred_check_branch
      %37 = sbr.rel (0) target = $region13
    $region12: #{tpu_custom_call.1} parent=1 // pred_region
      %s39 = ssub.s32 16, 16
      %40 = vsyncadd [#allocation5], %s39
      %s42 = sshll.u32 %s2, 4
      %s43 = int_to_ptr.vmem [resolvable:$true] %s42
      %45 = dma.vmem_to_smem %s43, 16, [#allocation8], [#allocation5]
    $region13: #{tpu_custom_call.1} parent=1 // pred_fallthru
      _
    // Predicated region
    $region14: #{tpu_custom_call.1} parent=1 // pred_check
      _
    $region15: #{tpu_custom_call.1} parent=1 // pred_check_branch
      %47 = sbr.rel (0) target = $region17
    $region16: #{tpu_custom_call.1} parent=1 // pred_region
      %48 = dma.done [#allocation3], 256
    $region17: #{tpu_custom_call.1} parent=1 // pred_fallthru
      _
    // Predicated region
    $region18: #{tpu_custom_call.1} parent=1 // pred_check
      _
    $region19: #{tpu_custom_call.1} parent=1 // pred_check_branch
      %50 = sbr.rel (0) target = $region21
    $region20: #{tpu_custom_call.1} parent=1 // pred_region
      %51 = dma.done [#allocation7], 256
    $region21: #{tpu_custom_call.1} parent=1 // pred_fallthru
      _
    // Predicated region
    $region22: #{tpu_custom_call.1} parent=1 // pred_check
      _
    $region23: #{tpu_custom_call.1} parent=1 // pred_check_branch
      %53 = sbr.rel (0) target = $region25
    $region24: #{tpu_custom_call.1} parent=1 // pred_region
      %54 = dma.done [#allocation5], 16
    $region25: #{tpu_custom_call.1} parent=1 // pred_fallthru
      _
    %55 = sfence
    %v56 = vld [vmem:[#allocation2] sm:$0xff]
    %v57 = vld [vmem:[#allocation2 + $0x8] sm:$0xff]
    %v60 = vcombine.high %v56, %v56
    %v61 = vcombine.high %v57, %v57
    %vm64 = vcmask 1043456
    %v65 = vsel %vm64, %v56, 0.0
    %v66 = vsel %vm64, %v60, 0.0
    %v67 = vadd.f32 %v65, %v66
    %68 = vadd.xlane.f32.xlu0 %v67
    %v69 = vpop.xlane.xlu0 %68
    %v70 = vsel %vm64, %v57, 0.0
    %v71 = vsel %vm64, %v61, 0.0
    %v72 = vadd.f32 %v70, %v71
    %73 = vadd.xlane.f32.xlu0 %v72
    %v74 = vpop.xlane.xlu0 %73
    %v75 = vmul.f32 %v69, 0.00390625
    %v76 = vmul.f32 %v74, 0.00390625
    %v79 = vlaneseq
    %v80 = vand.u32 %v79, 127
    %v81 = vadd.s32 %v80, 4294967295
    %v82 = vlaneseq
    %v83 = vshrl.u32 %v82, 7
    %v84 = vsub.s32 %v81, %v83
    %v85 = vrot.slane %v75, %v84
    %v86 = vlaneseq
    %v87 = vshrl.u32 %v86, 7
    %v88 = vsub.s32 %v81, %v87
    %v89 = vrot.slane %v76, %v88
    %vm90 = vcmask 1041409
    %v91 = vsel %vm90, %v89, %v85
    %vm93 = vcmask 7168
    %v94 = vsel %vm93, 0.0, %v91
    %vm95 = vcmask 39936
    %v96 = vsel %vm95, %v94, 0.0
    %s97 = sld [smem:[#allocation8]]
    %v98 = vstv %s97
    %v99 = vmul.f32 %v98, %v96
    %s100 = sld [smem:[#allocation8 + $0x1]]
    %v101 = vstv %s100
    %v102 = vmul.f32 %v101, %v96
    %104 = vrot.lane.b32.xlu0 %v102, 127
    %v105 = vpop.permute.xlu0 %104
    %v107 = vadd.f32 %v99, %v105
    %s108 = sld [smem:[#allocation8 + $0x2]]
    %v109 = vstv %s108
    %v110 = vmul.f32 %v109, %v96
    %112 = vrot.lane.b32.xlu0 %v110, 126
    %v113 = vpop.permute.xlu0 %112
    %v115 = vadd.f32 %v107, %v113
    %v116 = vxor.u32 %v115, 2147483648
    %v117 = vmul.f32 %v116, 1.442695
    %v118 = vpow.pop %v117
    %v119 = vadd.f32 %v118, 1.0
    %v120 = vrcp.pop %v119
    %v121 = vmul.f32 1.0, %v120
    %v122 = vlaneseq
    %v123 = vshrl.u32 %v122, 7
    %v124 = vsub.s32 0, %v123
    %v125 = vrot.slane %v121, %v124
    %127 = vbcast.lane.b32.xlu0 %v125, 256
    %v128 = vpop.permute.xlu0 %127
    %v129 = vlaneseq
    %v130 = vshrl.u32 %v129, 7
    %v131 = vsub.s32 1, %v130
    %v132 = vrot.slane %v121, %v131
    %134 = vbcast.lane.b32.xlu0 %v132, 256
    %v135 = vpop.permute.xlu0 %134
    %v139 = vunpack.c.l.s4 839922192
    %v140 = vunpack.c.0.s8 %v139
    %v141 = vlaneseq
    %v142 = vshrl.u32 %v141, 7
    %v143 = vsub.s32 %v140, %v142
    %v144 = vrot.slane %v128, %v143
    %v146 = vunpack.c.l.s4 839922192
    %v147 = vunpack.c.0.s8 %v146
    %v148 = vlaneseq
    %v149 = vshrl.u32 %v148, 7
    %v150 = vsub.s32 %v147, %v149
    %v151 = vrot.slane %v135, %v150
    %v154 = vmul.f32 %v56, %v144
    %v155 = vmul.f32 %v57, %v151
    %v156 = vld [vmem:[#allocation6] sm:$0xff]
    %v157 = vld [vmem:[#allocation6 + $0x8] sm:$0xff]
    %v158 = vadd.f32 %v154, %v156
    %v159 = vadd.f32 %v155, %v157
    %160 = vst [vmem:[#allocation9] sm:$0xff] %v158
    %161 = vst [vmem:[#allocation9 + $0x8] sm:$0xff] %v159
    // Predicated region
    $region26: #{tpu_custom_call.1} parent=1 // pred_check
      _
    $region27: #{tpu_custom_call.1} parent=1 // pred_check_branch
      %163 = sbr.rel (0) target = $region29
    $region28: #{tpu_custom_call.1} parent=1 // pred_region
      %s165 = ssub.s32 256, 256
      %166 = vsyncadd [#allocation4], %s165
      %s167 = sshll.u32 [#allocation9], 4
      %s168 = int_to_ptr.vmem [resolvable:$true] %s167
      %173 = dma.vmem_to_hbm [thread:$0]  %s168, 256, %s3, [#allocation4], 128, 128, 8
    $region29: #{tpu_custom_call.1} parent=1 // pred_fallthru
      _
    // Predicated region
    $region30: #{tpu_custom_call.1} parent=1 // pred_check
      _
    $region31: #{tpu_custom_call.1} parent=1 // pred_check_branch
      %175 = sbr.rel (0) target = $region33
    $region32: #{tpu_custom_call.1} parent=1 // pred_region
      %176 = dma.done [#allocation4], 256
    $region33: #{tpu_custom_call.1} parent=1 // pred_fallthru
      _
    %177 = vsyncpa [#allocation3], 1
    %178 = vsyncpa [#allocation7], 1
    %179 = vsyncpa [#allocation4], 1
    %180 = vsyncpa [#allocation5], 1

</llo_original>
